<compile_context>
chip_gen: v6e
topology: v6e:2x2x1
jax: 0.10.0
libtpu: 0.0.40
codegen_flags: <defaults>
</compile_context>

<pallas_src>
import jax
import jax.numpy as jnp
from jax.experimental import pallas as pl
from jax.experimental.pallas import tpu as pltpu

IN_DIM = 10
H1 = 50
H2 = 20
# TODO(synk): OUT_DIM is y.shape[1] from training_data.csv in the original
# script; fixed to 5 here because the CSV is not available in-script.
OUT_DIM = 5

# Max batch tile (lane axis). Multiple of 128; ~5 MiB of per-step VMEM incl.
# double-buffered x/out streams -> fits every generation's scoped-VMEM budget.
TB_MAX = 8192


def _round_up(n, m):
    return ((n + m - 1) // m) * m


def _prepare_weights(params):
    """Augment weights so layer-2/3 biases are folded into the MXU matmuls.

    Layer 1 gains one extra output row with zero weights and bias 1, so after
    ReLU the (H1+1)-th activation row is identically 1.  Layers 2/3 then pick
    their bias up from that ones row via an extra weight column (layer 2 also
    propagates a ones row forward for layer 3).  Done once, wrapper-side, on
    ~1.6k floats — zero extra HBM traffic per sample.
    """
    w1, b1, w2, b2, w3, b3 = params
    w1e = jnp.concatenate([w1, jnp.zeros((1, IN_DIM), w1.dtype)], axis=0)   # (H1+1, IN)
    b1e = jnp.concatenate([b1, jnp.ones((1, 1), b1.dtype)], axis=0)         # (H1+1, 1)
    w2e = jnp.concatenate([w2, b2], axis=1)                                 # (H2, H1+1)
    ones_row = jnp.zeros((1, H1 + 1), w2.dtype).at[0, H1].set(1.0)
    w2e = jnp.concatenate([w2e, ones_row], axis=0)                          # (H2+1, H1+1)
    w3e = jnp.concatenate([w3, b3], axis=1)                                 # (OUT, H2+1)
    return (w1e.astype(jnp.bfloat16), b1e,
            w2e.astype(jnp.bfloat16), w3e.astype(jnp.bfloat16))


def mlp_kernel(x_ref, w1_ref, b1_ref, w2_ref, w3_ref, o_ref):
    # x_ref: (tb, IN_DIM) f32 (batch on sublanes, native layout — no wrapper
    # transpose); weights bf16, VMEM-resident; b1_ref: (H1+1, 1) f32;
    # o_ref: (OUT_DIM, tb) f32 (batch on lanes -> lane-dense stores).
    xb = x_ref[...].astype(jnp.bfloat16)                     # (tb, IN_DIM)

    # Layer 1: NT matmul (contract feature dim of both operands) -> (H1+1, tb).
    # Row H1 of the result is 0*x + 1 -> ReLU -> 1 (the "ones" row).
    h1 = jnp.maximum(
        jax.lax.dot_general(
            w1_ref[...], xb, (((1,), (1,)), ((), ())),
            preferred_element_type=jnp.float32) + b1_ref[...],
        0.0).astype(jnp.bfloat16)                            # (H1+1, tb)

    # Layer 2: bias folded into w2e via the ones row of h1 -> (H2+1, tb);
    # row H2 is again the ones row for layer 3.
    h2 = jnp.maximum(
        jnp.dot(w2_ref[...], h1, preferred_element_type=jnp.float32),
        0.0).astype(jnp.bfloat16)                            # (H2+1, tb)

    # Layer 3: bias folded into w3e via the ones row of h2; no ReLU.
    o_ref[...] = jnp.dot(w3_ref[...], h2,
                         preferred_element_type=jnp.float32).astype(o_ref.dtype)


def neural_network_forward(x, params):
    """x: (batch, IN_DIM) f32  ->  (batch, OUT_DIM) f32."""
    batch = x.shape[0]

    # Batch tile: multiple of 128 lanes, capped at TB_MAX, and also capped so
    # large batches produce >= 2 grid steps (v7x megacore sharding).
    tb = min(TB_MAX, _round_up(pl.cdiv(batch, 2), 128))
    grid = (pl.cdiv(batch, tb),)     # partial last block handled by Pallas

    w1e, b1e, w2e, w3e = _prepare_weights(params)

    # Whole-array, untiled, VMEM-resident across all grid steps.
    resident = pl.BlockSpec(memory_space=pltpu.MemorySpace.VMEM)

    out_t = pl.pallas_call(
        mlp_kernel,
        out_shape=jax.ShapeDtypeStruct((OUT_DIM, batch), jnp.float32),
        grid=grid,
        in_specs=[
            pl.BlockSpec((tb, IN_DIM), lambda i: (i, 0)),   # x: streamed tiles
            resident,  # w1e
            resident,  # b1e
            resident,  # w2e
            resident,  # w3e
        ],
        out_specs=pl.BlockSpec((OUT_DIM, tb), lambda i: (0, i)),
        compiler_params=pltpu.CompilerParams(
            dimension_semantics=("parallel",),   # megacore sharding on v7x
            vmem_limit_bytes=32 * 1024 * 1024,   # safe on v5e/v6e/v7x
        ),
    )(x, w1e, b1e, w2e, w3e)

    # Tiny post-pass: (OUT_DIM, batch) -> conventional (batch, OUT_DIM).
    return jnp.transpose(out_t)


def init_params(key):
    # torch.nn.Linear default init: U(-1/sqrt(fan_in), +1/sqrt(fan_in)) for
    # both weight and bias.  Weights in torch layout (out, in); biases as
    # (out, 1) columns so they broadcast over batch lanes.
    keys = jax.random.split(key, 6)

    def linear(kw, kb, fan_in, fan_out):
        bound = 1.0 / jnp.sqrt(jnp.float32(fan_in))
        w = jax.random.uniform(kw, (fan_out, fan_in), jnp.float32, -bound, bound)
        b = jax.random.uniform(kb, (fan_out, 1), jnp.float32, -bound, bound)
        return w, b

    w1, b1 = linear(keys[0], keys[1], IN_DIM, H1)
    w2, b2 = linear(keys[2], keys[3], H1, H2)
    w3, b3 = linear(keys[4], keys[5], H2, OUT_DIM)
    return (w1, b1, w2, b2, w3, b3)


def reference_forward_bf16(x, params):
    # Plain-JAX reference using exactly the kernel's augmented-weight /
    # bf16-matmul / f32-accumulate math (tight numerical cross-check).
    w1e, b1e, w2e, w3e = _prepare_weights(params)
    xb = x.astype(jnp.bfloat16)
    h1 = jnp.maximum(
        jax.lax.dot_general(w1e, xb, (((1,), (1,)), ((), ())),
                            preferred_element_type=jnp.float32) + b1e, 0.0)
    h2 = jnp.maximum(
        jnp.dot(w2e, h1.astype(jnp.bfloat16),
                preferred_element_type=jnp.float32), 0.0)
    out = jnp.dot(w3e, h2.astype(jnp.bfloat16),
                  preferred_element_type=jnp.float32)
    return jnp.transpose(out)


def reference_forward_f32(x, params):
    # Full-precision reference matching the original torch module exactly.
    w1, b1, w2, b2, w3, b3 = params
    h1 = jnp.maximum(x @ w1.T + b1.T, 0.0)
    h2 = jnp.maximum(h1 @ w2.T + b2.T, 0.0)
    return h2 @ w3.T + b3.T


if __name__ == "__main__":
    key = jax.random.PRNGKey(0)
    k_params, k_x = jax.random.split(key)

    params = init_params(k_params)
    batch = 8
    x = jax.random.normal(k_x, (batch, IN_DIM), dtype=jnp.float32)

    out = neural_network_forward(x, params)
    out = jax.block_until_ready(out)
    assert out.shape == (batch, OUT_DIM)

    # Tight check vs the bf16-matched reference, loose check vs the exact f32
    # torch-equivalent forward (bf16 weight/input cast costs ~1e-2 abs error).
    ref_bf16 = reference_forward_bf16(x, params)
    ref_f32 = reference_forward_f32(x, params)
    assert jnp.allclose(out, ref_bf16, atol=2e-3, rtol=2e-3), (
        float(jnp.max(jnp.abs(out - ref_bf16))))
    assert jnp.allclose(out, ref_f32, atol=5e-2, rtol=5e-2), (
        float(jnp.max(jnp.abs(out - ref_f32))))

    print("KERNEL_OK")
</pallas_src>

<mosaic_0001>
module attributes {stable_mosaic.version = 11 : i64} {
  func.func @mlp_kernel(%arg0: i32, %arg1: memref<128x10xf32, #tpu.memory_space<vmem>>, %arg2: memref<51x10xbf16, #tpu.memory_space<vmem>>, %arg3: memref<51x1xf32, #tpu.memory_space<vmem>>, %arg4: memref<21x51xbf16, #tpu.memory_space<vmem>>, %arg5: memref<5x21xbf16, #tpu.memory_space<vmem>>, %arg6: memref<5x128xf32, #tpu.memory_space<vmem>>) attributes {dimension_semantics = [#tpu.dimension_semantics<parallel>], iteration_bounds = array<i64: 1>, scalar_prefetch = 0 : i64, scratch_operands = 0 : i64, tpu.core_type = #tpu.core_type<tc>, window_params = [{transform_indices = @transform_0, window_bounds = array<i64: 128, 10>}, {pipeline_mode = #tpu.pipeline_mode<synchronous>, transform_indices = @transform_1, window_bounds = array<i64: 51, 10>}, {pipeline_mode = #tpu.pipeline_mode<synchronous>, transform_indices = @transform_2, window_bounds = array<i64: 51, 1>}, {pipeline_mode = #tpu.pipeline_mode<synchronous>, transform_indices = @transform_3, window_bounds = array<i64: 21, 51>}, {pipeline_mode = #tpu.pipeline_mode<synchronous>, transform_indices = @transform_4, window_bounds = array<i64: 5, 21>}, {transform_indices = @transform_5, window_bounds = array<i64: 5, 128>}]} {
    %c0 = arith.constant 0 : index
    %c0_0 = arith.constant 0 : index
    %0 = vector.load %arg1[%c0, %c0_0] : memref<128x10xf32, #tpu.memory_space<vmem>>, vector<128x10xf32>
    %1 = arith.truncf %0 : vector<128x10xf32> to vector<128x10xbf16>
    %c0_1 = arith.constant 0 : index
    %c0_2 = arith.constant 0 : index
    %2 = vector.load %arg2[%c0_1, %c0_2] : memref<51x10xbf16, #tpu.memory_space<vmem>>, vector<51x10xbf16>
    %cst = arith.constant dense<0.000000e+00> : vector<51x128xf32>
    %3 = tpu.matmul %2, %1, %cst {dimension_numbers = #tpu.dot_dimension_numbers<[1], [1], [0], [0], [0, 0, 1, 0], [], []>} : vector<51x10xbf16>, vector<128x10xbf16>, vector<51x128xf32> -> vector<51x128xf32>
    %c0_3 = arith.constant 0 : index
    %c0_4 = arith.constant 0 : index
    %4 = vector.load %arg3[%c0_3, %c0_4] : memref<51x1xf32, #tpu.memory_space<vmem>>, vector<51x1xf32>
    %5 = vector.broadcast %4 : vector<51x1xf32> to vector<51x128xf32>
    %6 = arith.addf %3, %5 : vector<51x128xf32>
    %cst_5 = arith.constant 0.000000e+00 : f32
    %7 = vector.broadcast %cst_5 : f32 to vector<51x128xf32>
    %8 = arith.maximumf %6, %7 : vector<51x128xf32>
    %9 = arith.truncf %8 : vector<51x128xf32> to vector<51x128xbf16>
    %c0_6 = arith.constant 0 : index
    %c0_7 = arith.constant 0 : index
    %10 = vector.load %arg4[%c0_6, %c0_7] : memref<21x51xbf16, #tpu.memory_space<vmem>>, vector<21x51xbf16>
    %cst_8 = arith.constant dense<0.000000e+00> : vector<21x128xf32>
    %11 = tpu.matmul %10, %9, %cst_8 {dimension_numbers = #tpu.dot_dimension_numbers<[1], [0], [0], [1], [0, 0, 1, 1], [], []>} : vector<21x51xbf16>, vector<51x128xbf16>, vector<21x128xf32> -> vector<21x128xf32>
    %cst_9 = arith.constant 0.000000e+00 : f32
    %12 = vector.broadcast %cst_9 : f32 to vector<21x128xf32>
    %13 = arith.maximumf %11, %12 : vector<21x128xf32>
    %14 = arith.truncf %13 : vector<21x128xf32> to vector<21x128xbf16>
    %c0_10 = arith.constant 0 : index
    %c0_11 = arith.constant 0 : index
    %15 = vector.load %arg5[%c0_10, %c0_11] : memref<5x21xbf16, #tpu.memory_space<vmem>>, vector<5x21xbf16>
    %cst_12 = arith.constant dense<0.000000e+00> : vector<5x128xf32>
    %16 = tpu.matmul %15, %14, %cst_12 {dimension_numbers = #tpu.dot_dimension_numbers<[1], [0], [0], [1], [0, 0, 1, 1], [], []>} : vector<5x21xbf16>, vector<21x128xbf16>, vector<5x128xf32> -> vector<5x128xf32>
    %c0_13 = arith.constant 0 : index
    %c0_14 = arith.constant 0 : index
    %17 = vector.load %arg6[%c0_13, %c0_14] : memref<5x128xf32, #tpu.memory_space<vmem>>, vector<5x128xf32>
    tpu.vector_store %arg6[%c0_13, %c0_14], %16 {strides = array<i32>} : memref<5x128xf32, #tpu.memory_space<vmem>>, vector<5x128xf32>,
    return
  }
  func.func @transform_0(%arg0: i32) -> (i32, i32) {
    %c0_i32 = arith.constant 0 : i32
    %c0_i32_0 = arith.constant 0 : i32
    return %arg0, %c0_i32 : i32, i32
  }
  func.func @transform_1(%arg0: i32) -> (i32, i32) {
    %c0_i32 = arith.constant 0 : i32
    %c0_i32_0 = arith.constant 0 : i32
    %c0_i32_1 = arith.constant 0 : i32
    return %c0_i32, %c0_i32_0 : i32, i32
  }
  func.func @transform_2(%arg0: i32) -> (i32, i32) {
    %c0_i32 = arith.constant 0 : i32
    %c0_i32_0 = arith.constant 0 : i32
    %c0_i32_1 = arith.constant 0 : i32
    return %c0_i32, %c0_i32_0 : i32, i32
  }
  func.func @transform_3(%arg0: i32) -> (i32, i32) {
    %c0_i32 = arith.constant 0 : i32
    %c0_i32_0 = arith.constant 0 : i32
    %c0_i32_1 = arith.constant 0 : i32
    return %c0_i32, %c0_i32_0 : i32, i32
  }
  func.func @transform_4(%arg0: i32) -> (i32, i32) {
    %c0_i32 = arith.constant 0 : i32
    %c0_i32_0 = arith.constant 0 : i32
    %c0_i32_1 = arith.constant 0 : i32
    return %c0_i32, %c0_i32_0 : i32, i32
  }
  func.func @transform_5(%arg0: i32) -> (i32, i32) {
    %c0_i32 = arith.constant 0 : i32
    %c0_i32_0 = arith.constant 0 : i32
    return %c0_i32, %arg0 : i32, i32
  }
}

</mosaic_0001>

<llo_original>
// kernel: tpu_custom_call.1
$region0: #{tpu_custom_call.1}
  #allocation0 [shape = 'u32[]', space=smem, size = 0x4, offset = 0x4, fixed_abs, tag = 'smem constant byte address 0x4 - core index']
  #allocation1 [shape = 'u32[144,128]{1,0:T(1,128)}', space=vmem, size = 0x12000, scoped, tag = 'internal scratch']
  %s0 = inlined_call_operand.vmem [shape: f32[8,10], index: 0, kind: input, shape index: {}]
  %s1 = inlined_call_operand.vmem [shape: bf16[51,10], index: 1, kind: input, shape index: {}]
  %s2 = inlined_call_operand.vmem [shape: f32[51,1], index: 2, kind: input, shape index: {}]
  %s3 = inlined_call_operand.vmem [shape: bf16[21,51], index: 3, kind: input, shape index: {}]
  %s4 = inlined_call_operand.vmem [shape: bf16[5,21], index: 4, kind: input, shape index: {}]
  %s5 = inlined_call_operand.hbm [shape: f32[5,8], index: 5, kind: output, shape index: {}]
  %s6 = sld [smem:[#allocation0]]
  $region30: #{tpu_custom_call.1} parent=0
    _
  %s8 = ssub.s32 1, %s6
  %s9 = scalar_select 0, %s8, %s6
  $region1: #{tpu_custom_call.1} parent=0
    #allocation2 [shape = 'u8[4096]{0}', space=vmem, size = 0x1000, scoped, tag = 'output window, operand 0, single buffered']
    #allocation3 [shape = 's32[1]{0}', space=sflag, size = 0x4, scoped, tag = 'scoped memory for tpu_custom_call.1']
    %10 = vsyncpa [#allocation3], 0
    // Predicated region
    $region2: #{tpu_custom_call.1} parent=1 // pred_check
      _
    $region3: #{tpu_custom_call.1} parent=1 // pred_check_branch
      %12 = sbr.rel (0) target = $region5
    $region4: #{tpu_custom_call.1} parent=1 // pred_region
      _
    $region5: #{tpu_custom_call.1} parent=1 // pred_fallthru
      _
    // Predicated region
    $region6: #{tpu_custom_call.1} parent=1 // pred_check
      _
    $region7: #{tpu_custom_call.1} parent=1 // pred_check_branch
      %14 = sbr.rel (0) target = $region9
    $region8: #{tpu_custom_call.1} parent=1 // pred_region
      _
    $region9: #{tpu_custom_call.1} parent=1 // pred_fallthru
      _
    // Predicated region
    $region10: #{tpu_custom_call.1} parent=1 // pred_check
      _
    $region11: #{tpu_custom_call.1} parent=1 // pred_check_branch
      %16 = sbr.rel (0) target = $region13
    $region12: #{tpu_custom_call.1} parent=1 // pred_region
      _
    $region13: #{tpu_custom_call.1} parent=1 // pred_fallthru
      _
    // Predicated region
    $region14: #{tpu_custom_call.1} parent=1 // pred_check
      _
    $region15: #{tpu_custom_call.1} parent=1 // pred_check_branch
      %18 = sbr.rel (0) target = $region17
    $region16: #{tpu_custom_call.1} parent=1 // pred_region
      _
    $region17: #{tpu_custom_call.1} parent=1 // pred_fallthru
      _
    // Predicated region
    $region18: #{tpu_custom_call.1} parent=1 // pred_check
      _
    $region19: #{tpu_custom_call.1} parent=1 // pred_check_branch
      %20 = sbr.rel (0) target = $region21
    $region20: #{tpu_custom_call.1} parent=1 // pred_region
      _
    $region21: #{tpu_custom_call.1} parent=1 // pred_fallthru
      _
    %v22 = vld [vmem:[%s0] sm:$0xff]
    %v23 = vld [vmem:[%s0 + $0x8] sm:$0xff]
    %v24 = vld [vmem:[%s0 + $0x10] sm:$0xff]
    %v25 = vld [vmem:[%s0 + $0x18] sm:$0xff]
    %v26 = vld [vmem:[%s0 + $0x20] sm:$0xff]
    %v27 = vld [vmem:[%s0 + $0x28] sm:$0xff]
    %v28 = vld [vmem:[%s0 + $0x30] sm:$0xff]
    %v29 = vld [vmem:[%s0 + $0x38] sm:$0xff]
    %v30 = vld [vmem:[%s0 + $0x40] sm:$0xff]
    %v31 = vld [vmem:[%s0 + $0x48] sm:$0xff]
    %v32 = vld [vmem:[%s0 + $0x50] sm:$0xff]
    %v33 = vld [vmem:[%s0 + $0x58] sm:$0xff]
    %v34 = vld [vmem:[%s0 + $0x60] sm:$0xff]
    %v35 = vld [vmem:[%s0 + $0x68] sm:$0xff]
    %v36 = vld [vmem:[%s0 + $0x70] sm:$0xff]
    %v37 = vld [vmem:[%s0 + $0x78] sm:$0xff]
    %v38 = vpack.c.bf16 %v23, %v22
    %v39 = vpack.c.bf16 %v25, %v24
    %v40 = vpack.c.bf16 %v27, %v26
    %v41 = vpack.c.bf16 %v29, %v28
    %v42 = vpack.c.bf16 %v31, %v30
    %v43 = vpack.c.bf16 %v33, %v32
    %v44 = vpack.c.bf16 %v35, %v34
    %v45 = vpack.c.bf16 %v37, %v36
    %v46 = vld [vmem:[%s1] sm:$0xf]
    %v47 = vld [vmem:[%s1 + $0x4] sm:$0xf]
    %v48 = vld [vmem:[%s1 + $0x8] sm:$0xf]
    %v49 = vld [vmem:[%s1 + $0xc] sm:$0xf]
    %v50 = vld [vmem:[%s1 + $0x10] sm:$0xf]
    %v51 = vld [vmem:[%s1 + $0x14] sm:$0xf]
    %v52 = vld [vmem:[%s1 + $0x18] sm:$0x3]
    %v53 = vld [vmem:[%s2] sm:$0xff]
    %v54 = vld [vmem:[%s2 + $0x8] sm:$0xff]
    %v55 = vld [vmem:[%s2 + $0x10] sm:$0xff]
    %v56 = vld [vmem:[%s2 + $0x18] sm:$0xff]
    %v57 = vld [vmem:[%s2 + $0x20] sm:$0xff]
    %v58 = vld [vmem:[%s2 + $0x28] sm:$0xff]
    %v59 = vld [vmem:[%s2 + $0x30] sm:$0x7]
    %61 = vset.pattern.permute.xlu0 0
    %62 = vperm.xlu0 %61, %v53
    %v63 = vpop.permute.xlu0 %62
    %66 = vset.pattern.permute.xlu0 0
    %67 = vperm.xlu0 %66, %v54
    %v68 = vpop.permute.xlu0 %67
    %71 = vset.pattern.permute.xlu0 0
    %72 = vperm.xlu0 %71, %v55
    %v73 = vpop.permute.xlu0 %72
    %76 = vset.pattern.permute.xlu0 0
    %77 = vperm.xlu0 %76, %v56
    %v78 = vpop.permute.xlu0 %77
    %81 = vset.pattern.permute.xlu0 0
    %82 = vperm.xlu0 %81, %v57
    %v83 = vpop.permute.xlu0 %82
    %86 = vset.pattern.permute.xlu0 0
    %87 = vperm.xlu0 %86, %v58
    %v88 = vpop.permute.xlu0 %87
    %91 = vset.pattern.permute.xlu0 0
    %92 = vperm.xlu0 %91, %v59
    %v93 = vpop.permute.xlu0 %92
    %v102 = vunpack.c.l.b16 %v46
    %v103 = vunpack.c.l.b16 %v47
    %v104 = vunpack.c.l.b16 %v48
    %v105 = vunpack.c.l.b16 %v49
    %v106 = vunpack.c.l.b16 %v50
    %v107 = vunpack.c.l.b16 %v51
    %v108 = vunpack.c.l.b16 %v52
    %v109 = vpack.c.b16 %v103, %v102
    %v110 = vpack.c.b16 %v105, %v104
    %v111 = vpack.c.b16 %v107, %v106
    %v112 = vpack.c.b16 %v108, %v108
    %vm113 = vcmask 80896
    %v115 = vsel %vm113, %v109, 0
    %v118 = vsel %vm113, %v110, 0
    %v121 = vsel %vm113, %v111, 0
    %v124 = vsel %vm113, %v112, 0
    %v127 = vsel %vm113, %v38, 0
    %v130 = vsel %vm113, %v39, 0
    %v133 = vsel %vm113, %v40, 0
    %v136 = vsel %vm113, %v41, 0
    %v139 = vsel %vm113, %v42, 0
    %v142 = vsel %vm113, %v43, 0
    %v145 = vsel %vm113, %v44, 0
    %v148 = vsel %vm113, %v45, 0
    %150 = vmatprep.subr.bf16.mxu0 0
    %151 = vmatpush1.bf16.xpose.msra.mxu0 %v148
    %152 = vmatprep.subr.bf16.mxu0 0
    %153 = vmatpush1.bf16.xpose.msra.mxu0 %v145
    %154 = vmatprep.subr.bf16.mxu0 0
    %155 = vmatpush1.bf16.xpose.msra.mxu0 %v142
    %156 = vmatprep.subr.bf16.mxu0 0
    %157 = vmatpush1.bf16.xpose.msra.mxu0 %v139
    %158 = vmatprep.subr.bf16.mxu0 0
    %159 = vmatpush1.bf16.xpose.msra.mxu0 %v136
    %160 = vmatprep.subr.bf16.mxu0 0
    %161 = vmatpush1.bf16.xpose.msra.mxu0 %v133
    %162 = vmatprep.subr.bf16.mxu0 0
    %163 = vmatpush1.bf16.xpose.msra.mxu0 %v130
    %164 = vmatprep.subr.bf16.mxu0 0
    %165 = vmatpush1.bf16.xpose.msra.mxu0 %v127
    %166 = vmatprep.subr.bf16.mxu0 0
    %167 = vmatpush2.bf16.xpose.msra.mxu0 0
    %168 = vmatprep.subr.bf16.mxu0 0
    %169 = vmatpush2.bf16.xpose.msra.mxu0 0
    %170 = vmatprep.subr.bf16.mxu0 0
    %171 = vmatpush2.bf16.xpose.msra.mxu0 0
    %172 = vmatprep.subr.bf16.mxu0 0
    %173 = vmatpush2.bf16.xpose.msra.mxu0 0
    %174 = vmatprep.subr.bf16.mxu0 0
    %175 = vmatpush2.bf16.xpose.msra.mxu0 0
    %176 = vmatprep.subr.bf16.mxu0 0
    %177 = vmatpush2.bf16.xpose.msra.mxu0 0
    %178 = vmatprep.subr.bf16.mxu0 0
    %179 = vmatpush2.bf16.xpose.msra.mxu0 0
    %180 = vmatprep.subr.bf16.mxu0 0
    %181 = vmatpush2.bf16.xpose.msra.mxu0 0
    %182 = vmatprep.mubr.bf16.mxu0 0
    %183 = vmatmul.mubr.bf16.gmra.mxu0 %v115
    %v184 = vpop.f32.mrf.mxu0
    %v185 = vadd.f32 %v63, %v184
    %v186 = vpop.f32.mrf.mxu0
    %v187 = vpop.f32.mrf.mxu0
    %v188 = vadd.f32 %v68, %v187
    %v189 = vpop.f32.mrf.mxu0
    %190 = vmatprep.mubr.bf16.mxu0 0
    %191 = vmatmul.mubr.bf16.gmra.mxu0 %v118
    %v192 = vpop.f32.mrf.mxu0
    %v193 = vadd.f32 %v73, %v192
    %v194 = vpop.f32.mrf.mxu0
    %v195 = vpop.f32.mrf.mxu0
    %v196 = vadd.f32 %v78, %v195
    %v197 = vpop.f32.mrf.mxu0
    %198 = vmatprep.mubr.bf16.mxu0 0
    %199 = vmatmul.mubr.bf16.gmra.mxu0 %v121
    %v200 = vpop.f32.mrf.mxu0
    %v201 = vadd.f32 %v83, %v200
    %v202 = vpop.f32.mrf.mxu0
    %v203 = vpop.f32.mrf.mxu0
    %v204 = vadd.f32 %v88, %v203
    %v205 = vpop.f32.mrf.mxu0
    %206 = vmatprep.mubr.bf16.mxu0 0
    %207 = vmatmul.mubr.bf16.gmra.mxu0 %v124
    %v208 = vpop.f32.mrf.mxu0
    %v209 = vadd.f32 %v93, %v208
    %v210 = vpop.f32.mrf.mxu0
    %v211 = vpop.f32.mrf.mxu0
    %v212 = vpop.f32.mrf.mxu0
    %213 = vdwg.mxu0
    %v214 = vmax.f32 %v185, 0.0
    %v215 = vmax.f32 %v188, 0.0
    %v216 = vmax.f32 %v193, 0.0
    %v217 = vmax.f32 %v196, 0.0
    %v218 = vmax.f32 %v201, 0.0
    %v219 = vmax.f32 %v204, 0.0
    %v220 = vmax.f32 %v209, 0.0
    %v221 = vpack.c.bf16 %v215, %v214
    %v222 = vpack.c.bf16 %v217, %v216
    %v223 = vpack.c.bf16 %v219, %v218
    %v224 = vpack.c.bf16 %v220, %v220
    %v225 = vld [vmem:[%s3] sm:$0xf]
    %v226 = vld [vmem:[%s3 + $0x4] sm:$0xf]
    %v227 = vld [vmem:[%s3 + $0x8] sm:$0x7]
    %v231 = vunpack.c.l.b16 %v225
    %v232 = vunpack.c.l.b16 %v226
    %v233 = vunpack.c.l.b16 %v227
    %v234 = vpack.c.b16 %v232, %v231
    %v235 = vpack.c.b16 %v233, %v233
    %vm236 = vcmask 416768
    %v238 = vsel %vm236, %v234, 0
    %v241 = vsel %vm236, %v235, 0
    %vm243 = vcmask 1040384
    %vm244 = vcmask 1041408
    %v245 = vsel %vm243, 4294967295, 65535
    %v246 = vsel %vm244, %v245, 0
    %v248 = vand.u32 %v224, %v246
    %250 = vmatprep.subr.bf16.mxu0 0
    %251 = vmatpush1.bf16.msra.mxu0 0
    %252 = vmatprep.subr.bf16.mxu0 0
    %253 = vmatpush1.bf16.msra.mxu0 0
    %254 = vmatprep.subr.bf16.mxu0 0
    %255 = vmatpush1.bf16.msra.mxu0 0
    %256 = vmatprep.subr.bf16.mxu0 0
    %257 = vmatpush1.bf16.msra.mxu0 0
    %258 = vmatprep.subr.bf16.mxu0 0
    %259 = vmatpush1.bf16.msra.mxu0 %v248
    %260 = vmatprep.subr.bf16.mxu0 0
    %261 = vmatpush1.bf16.msra.mxu0 %v223
    %262 = vmatprep.subr.bf16.mxu0 0
    %263 = vmatpush1.bf16.msra.mxu0 %v222
    %264 = vmatprep.subr.bf16.mxu0 0
    %265 = vmatpush1.bf16.msra.mxu0 %v221
    %266 = vmatprep.subr.bf16.mxu0 0
    %267 = vmatpush2.bf16.msra.mxu0 0
    %268 = vmatprep.subr.bf16.mxu0 0
    %269 = vmatpush2.bf16.msra.mxu0 0
    %270 = vmatprep.subr.bf16.mxu0 0
    %271 = vmatpush2.bf16.msra.mxu0 0
    %272 = vmatprep.subr.bf16.mxu0 0
    %273 = vmatpush2.bf16.msra.mxu0 0
    %274 = vmatprep.subr.bf16.mxu0 0
    %275 = vmatpush2.bf16.msra.mxu0 0
    %276 = vmatprep.subr.bf16.mxu0 0
    %277 = vmatpush2.bf16.msra.mxu0 0
    %278 = vmatprep.subr.bf16.mxu0 0
    %279 = vmatpush2.bf16.msra.mxu0 0
    %280 = vmatprep.subr.bf16.mxu0 0
    %281 = vmatpush2.bf16.msra.mxu0 0
    %282 = vmatprep.mubr.bf16.mxu0 0
    %283 = vmatmul.mubr.bf16.gmra.mxu0 %v238
    %v284 = vpop.f32.mrf.mxu0
    %v285 = vadd.f32 0.0, %v284
    %v286 = vpop.f32.mrf.mxu0
    %v287 = vpop.f32.mrf.mxu0
    %v288 = vadd.f32 0.0, %v287
    %v289 = vpop.f32.mrf.mxu0
    %290 = vmatprep.mubr.bf16.mxu0 0
    %291 = vmatmul.mubr.bf16.gmra.mxu0 %v241
    %v292 = vpop.f32.mrf.mxu0
    %v293 = vadd.f32 0.0, %v292
    %v294 = vpop.f32.mrf.mxu0
    %v295 = vpop.f32.mrf.mxu0
    %v296 = vpop.f32.mrf.mxu0
    %297 = vdwg.mxu0
    %v298 = vmax.f32 %v285, 0.0
    %v299 = vmax.f32 %v288, 0.0
    %v300 = vmax.f32 %v293, 0.0
    %v301 = vpack.c.bf16 %v299, %v298
    %v302 = vpack.c.bf16 %v300, %v300
    %v303 = vld [vmem:[%s4] sm:$0x7]
    %vm304 = vcmask 171008
    %v306 = vsel %vm304, %v303, 0
    %vm308 = vcmask 1042432
    %v309 = vsel %vm244, 4294967295, 65535
    %v310 = vsel %vm308, %v309, 0
    %v312 = vand.u32 %v302, %v310
    %314 = vmatprep.subr.bf16.mxu0 0
    %315 = vmatpush1.bf16.msra.mxu0 0
    %316 = vmatprep.subr.bf16.mxu0 0
    %317 = vmatpush1.bf16.msra.mxu0 0
    %318 = vmatprep.subr.bf16.mxu0 0
    %319 = vmatpush1.bf16.msra.mxu0 0
    %320 = vmatprep.subr.bf16.mxu0 0
    %321 = vmatpush1.bf16.msra.mxu0 0
    %322 = vmatprep.subr.bf16.mxu0 0
    %323 = vmatpush1.bf16.msra.mxu0 0
    %324 = vmatprep.subr.bf16.mxu0 0
    %325 = vmatpush1.bf16.msra.mxu0 0
    %326 = vmatprep.subr.bf16.mxu0 0
    %327 = vmatpush1.bf16.msra.mxu0 %v312
    %328 = vmatprep.subr.bf16.mxu0 0
    %329 = vmatpush1.bf16.msra.mxu0 %v301
    %330 = vmatprep.subr.bf16.mxu0 0
    %331 = vmatpush2.bf16.msra.mxu0 0
    %332 = vmatprep.subr.bf16.mxu0 0
    %333 = vmatpush2.bf16.msra.mxu0 0
    %334 = vmatprep.subr.bf16.mxu0 0
    %335 = vmatpush2.bf16.msra.mxu0 0
    %336 = vmatprep.subr.bf16.mxu0 0
    %337 = vmatpush2.bf16.msra.mxu0 0
    %338 = vmatprep.subr.bf16.mxu0 0
    %339 = vmatpush2.bf16.msra.mxu0 0
    %340 = vmatprep.subr.bf16.mxu0 0
    %341 = vmatpush2.bf16.msra.mxu0 0
    %342 = vmatprep.subr.bf16.mxu0 0
    %343 = vmatpush2.bf16.msra.mxu0 0
    %344 = vmatprep.subr.bf16.mxu0 0
    %345 = vmatpush2.bf16.msra.mxu0 0
    %346 = vmatprep.mubr.bf16.mxu0 0
    %347 = vmatmul.mubr.bf16.gmra.mxu0 %v306
    %v348 = vpop.f32.mrf.mxu0
    %v349 = vadd.f32 0.0, %v348
    %v350 = vpop.f32.mrf.mxu0
    %v351 = vpop.f32.mrf.mxu0
    %v352 = vpop.f32.mrf.mxu0
    %353 = vdwg.mxu0
    %354 = vst [vmem:[#allocation2] sm:$0x1f] %v349
    // Predicated region
    $region22: #{tpu_custom_call.1} parent=1 // pred_check
      _
    $region23: #{tpu_custom_call.1} parent=1 // pred_check_branch
      %356 = sbr.rel (0) target = $region25
    $region24: #{tpu_custom_call.1} parent=1 // pred_region
      %s358 = ssub.s32 128, 128
      %359 = vsyncadd [#allocation3], %s358
      %s361 = sshll.u32 [#allocation2], 4
      %s362 = int_to_ptr.vmem [resolvable:$true] %s361
      %364 = dma.vmem_to_hbm [thread:$0]  %s362, 128, %s5, [#allocation3]
    $region25: #{tpu_custom_call.1} parent=1 // pred_fallthru
      _
    // Predicated region
    $region26: #{tpu_custom_call.1} parent=1 // pred_check
      _
    $region27: #{tpu_custom_call.1} parent=1 // pred_check_branch
      %366 = sbr.rel (0) target = $region29
    $region28: #{tpu_custom_call.1} parent=1 // pred_region
      %367 = dma.done [#allocation3], 128
    $region29: #{tpu_custom_call.1} parent=1 // pred_fallthru
      _
    %368 = vsyncpa [#allocation3], 1

</llo_original>
